<compile_context>
chip_gen: v7x
topology: tpu7x:2x2x1
jax: 0.10.0
libtpu: 0.0.40
codegen_flags: <defaults>
</compile_context>

<pallas_src>
import numpy as np

import jax
import jax.numpy as jnp
from jax import lax
from jax.experimental import pallas as pl
from jax.experimental.pallas import tpu as pltpu

_EPS = 1e-5  # PyTorch InstanceNorm2d default (affine=False, biased variance)


def _vmem_limit_bytes():
    """Request ~75% of physical per-core VMEM (leave headroom; 64 MiB is ALL of v7x)."""
    try:
        cap = getattr(pltpu.get_tpu_info(), "vmem_capacity_bytes", None)
        if cap:
            return int(cap) * 3 // 4      # ~96 MiB on v5e/v6e, ~48 MiB on v7x
    except Exception:
        pass
    return 48 * 1024 * 1024               # conservative fallback (fits v7x)


def _make_kernel(H, W, C_in, C_out, dilation, residual, has_input_conv, mm_dtype):
    d = dilation
    HW = H * W

    def _instance_norm(y):
        # y: (C, HW) f32; per-channel stats over the lane (H*W) axis.
        # Two-pass centered variance (review: E[x^2]-E[x]^2 cancels in f32).
        mu = jnp.sum(y, axis=1, keepdims=True) * (1.0 / HW)
        yc = y - mu
        var = jnp.sum(yc * yc, axis=1, keepdims=True) * (1.0 / HW)
        return yc * lax.rsqrt(var + _EPS)

    def kernel(*refs):
        if has_input_conv:
            (x_hbm, w0_ref, w1_ref, w2_ref, mask_ref, o_ref,
             x_vmem, patches, dma_sem) = refs
        else:
            (x_hbm, w1_ref, w2_ref, mask_ref, o_ref,
             x_vmem, patches, dma_sem) = refs

        # x is read exactly once: one manual DMA into a single VMEM buffer
        # (a size-1 grid cannot overlap anything, so pipeline double-buffering
        # of x would only waste VMEM).
        cp = pltpu.make_async_copy(x_hbm, x_vmem, dma_sem)
        cp.start()
        cp.wait()
        x = x_vmem[...]                                        # (C_in, HW) f32

        def conv3x3(act, w_ref):
            # act: (C_out, HW) f32.  SAME 3x3 dilated conv as ONE im2col matmul
            # W(C_out, 9C) @ patches(9C, HW), f32 accumulation.  Each tap is an
            # XLU lane rotation fused with one mask multiply and stored exactly
            # once into the persistent patch scratch (no concat, no padded buf).
            for ky in range(3):
                for kx in range(3):
                    t = ky * 3 + kx
                    off = (ky - 1) * d * W + (kx - 1) * d      # flat source offset
                    if off == 0:                               # centre tap: identity
                        tap = act
                    else:
                        # roll so tap[p] = act[p + off]; wrapped / out-of-image
                        # lanes are zeroed by the precomputed validity mask.
                        tap = pltpu.roll(act, (-off) % HW, axis=1)
                        tap = tap * mask_ref[t:t + 1, :]
                    patches[t * C_out:(t + 1) * C_out, :] = tap.astype(mm_dtype)
            return jnp.dot(w_ref[...], patches[...],
                           preferred_element_type=jnp.float32)  # (C_out, HW) f32

        if has_input_conv:
            # 1x1 conv (channel mixing) + InstanceNorm.  Conv bias dropped: a
            # per-channel constant cancels under the affine=False IN that follows.
            x = jnp.dot(w0_ref[...], x.astype(mm_dtype),
                        preferred_element_type=jnp.float32)
            x = _instance_norm(x)

        h = jnp.maximum(_instance_norm(conv3x3(x, w1_ref)), 0.0)   # conv+IN+ReLU
        y = _instance_norm(conv3x3(h, w2_ref))                     # conv+IN
        if residual:
            y = y + x
        o_ref[...] = jnp.maximum(y, 0.0)                           # (C_out, HW)

    return kernel


def basic_block_pallas(x_nchw, params, *, dilation=1, residual=True,
                       matmul_dtype=jnp.float32):
    """Forward pass of BasicBlock.  x_nchw: (1, C_in, H, W) float32.

    matmul_dtype:
      float32  -> matches the f32 reference to ~1e-3 (default; fine here since
                  at toy channel counts the kernel is vld/vst-bound, not MXU-bound).
      bfloat16 -> native MXU precision (use at production channel counts;
                  prefer C_out a multiple of 16 so packed patch stores stay
                  sublane-aligned).
    """
    N, C_in, H, W = x_nchw.shape
    assert N == 1, "BasicBlock operates on a single image (1 x C x L x L)"
    C_out = params["w1"].shape[-1]
    has_input_conv = (C_in != C_out)
    d = dilation
    HW = H * W

    # NCHW is already channel-major: (1, C, H, W) -> (C, HW) is a free reshape,
    # and HW on the lane axis keeps every load/store lane-dense.
    x_flat = x_nchw.reshape(C_in, HW).astype(jnp.float32)

    # im2col weight matrices (C_out, 9*C): column index = (ky*3+kx)*C + c_in,
    # matching the tap/channel order written into the patch scratch.
    w1m = jnp.transpose(params["w1"].reshape(9 * C_out, C_out), (1, 0)).astype(matmul_dtype)
    w2m = jnp.transpose(params["w2"].reshape(9 * C_out, C_out), (1, 0)).astype(matmul_dtype)

    # Per-tap validity masks (9, HW): tap (ky, kx) of pixel (r, c) reads
    # (r + (ky-1)d, c + (kx-1)d); zero when that source lies outside the image
    # (this also kills the roll wrap-around lanes).
    row = np.arange(HW, dtype=np.int64) // W
    col = np.arange(HW, dtype=np.int64) % W
    masks = np.zeros((9, HW), np.float32)
    for ky in range(3):
        for kx in range(3):
            dy, dx = (ky - 1) * d, (kx - 1) * d
            ok = ((row + dy >= 0) & (row + dy < H) &
                  (col + dx >= 0) & (col + dx < W))
            masks[ky * 3 + kx] = ok.astype(np.float32)
    masks = jnp.asarray(masks)

    def full(shape):
        return pl.BlockSpec(shape, lambda i, _n=len(shape): (0,) * _n)

    inputs = [x_flat]
    # x is read once -> raw HBM ref + one manual DMA (no pipeline double buffer).
    in_specs = [pl.BlockSpec(memory_space=pl.ANY)]
    if has_input_conv:
        inputs.append(jnp.transpose(params["w0"], (1, 0)).astype(matmul_dtype))
        in_specs.append(full((C_out, C_in)))
    inputs += [w1m, w2m, masks]
    in_specs += [full((C_out, 9 * C_out)), full((C_out, 9 * C_out)), full((9, HW))]
    # NOTE: biases b0/b1/b2 intentionally NOT passed (cancelled by the
    # affine=False InstanceNorm that immediately follows each conv).

    kernel = _make_kernel(H, W, C_in, C_out, d, residual, has_input_conv, matmul_dtype)

    out_flat = pl.pallas_call(
        kernel,
        out_shape=jax.ShapeDtypeStruct((C_out, HW), jnp.float32),
        grid=(1,),
        in_specs=in_specs,
        out_specs=full((C_out, HW)),
        scratch_shapes=[
            pltpu.VMEM((C_in, HW), jnp.float32),         # x landing buffer
            pltpu.VMEM((9 * C_out, HW), matmul_dtype),   # persistent im2col patches
            pltpu.SemaphoreType.DMA,                     # semaphore for the x copy
        ],
        compiler_params=pltpu.CompilerParams(
            dimension_semantics=("arbitrary",),
            vmem_limit_bytes=_vmem_limit_bytes()),
    )(*inputs)

    return out_flat.reshape(1, C_out, H, W)              # free reshape back to NCHW


# ----------------------------- pure-JAX reference -----------------------------

def _inorm_ref(x):  # NHWC, normalize per (n, c) over (H, W)
    mu = jnp.mean(x, axis=(1, 2), keepdims=True)
    var = jnp.mean((x - mu) ** 2, axis=(1, 2), keepdims=True)
    return (x - mu) * lax.rsqrt(var + _EPS)


def _conv_ref(x, w_hwio, b, dilation):
    y = lax.conv_general_dilated(
        x, w_hwio, window_strides=(1, 1),
        padding=[(dilation, dilation), (dilation, dilation)],
        rhs_dilation=(dilation, dilation),
        dimension_numbers=("NHWC", "HWIO", "NHWC"),
        precision=lax.Precision.HIGHEST)
    return y + b


def basic_block_ref(x_nchw, params, *, dilation=1, residual=True):
    x = jnp.transpose(x_nchw, (0, 2, 3, 1)).astype(jnp.float32)
    C_in = x.shape[-1]
    C_out = params["w1"].shape[-1]
    if C_in != C_out:
        x = _inorm_ref(x @ params["w0"] + params["b0"])
    h = jax.nn.relu(_inorm_ref(_conv_ref(x, params["w1"], params["b1"], dilation)))
    y = _inorm_ref(_conv_ref(h, params["w2"], params["b2"], dilation))
    if residual:
        y = y + x
    return jnp.transpose(jax.nn.relu(y), (0, 3, 1, 2))


# ----------------------------------- main -------------------------------------

def _make_params(key, C_in, C_out):
    ks = jax.random.split(key, 6)
    p = {
        "w1": jax.random.normal(ks[0], (3, 3, C_out, C_out), jnp.float32) * 0.1,
        "b1": jax.random.normal(ks[1], (C_out,), jnp.float32) * 0.1,
        "w2": jax.random.normal(ks[2], (3, 3, C_out, C_out), jnp.float32) * 0.1,
        "b2": jax.random.normal(ks[3], (C_out,), jnp.float32) * 0.1,
    }
    if C_in != C_out:
        p["w0"] = jax.random.normal(ks[4], (C_in, C_out), jnp.float32) * 0.1
        p["b0"] = jax.random.normal(ks[5], (C_out,), jnp.float32) * 0.1
    return p


if __name__ == "__main__":
    key = jax.random.PRNGKey(0)
    kx1, kp1, kx2, kp2, kx3, kp3 = jax.random.split(key, 6)
    H, W = 16, 16

    # Case 1: default-style block (in_channels == out_channels, dilation=1), f32 MXU.
    C = 8
    x1 = jax.random.normal(kx1, (1, C, H, W), jnp.float32)
    p1 = _make_params(kp1, C, C)
    out1 = jax.block_until_ready(
        basic_block_pallas(x1, p1, dilation=1, residual=True))
    ref1 = basic_block_ref(x1, p1, dilation=1, residual=True)
    np.testing.assert_allclose(np.asarray(out1), np.asarray(ref1),
                               rtol=1e-3, atol=1e-3)

    # Case 2: channel-changing block (1x1 input_conv path) with dilation=2, f32 MXU.
    C_in, C_out = 4, 8
    x2 = jax.random.normal(kx2, (1, C_in, H, W), jnp.float32)
    p2 = _make_params(kp2, C_in, C_out)
    out2 = jax.block_until_ready(
        basic_block_pallas(x2, p2, dilation=2, residual=True))
    ref2 = basic_block_ref(x2, p2, dilation=2, residual=True)
    np.testing.assert_allclose(np.asarray(out2), np.asarray(ref2),
                               rtol=1e-3, atol=1e-3)

    # Case 3: bf16 MXU operands (production setting per review; C_out multiple of
    # 16 keeps packed patch stores sublane-aligned).  Loose sanity bound vs the
    # f32 reference — bf16 rounding compounds through two convs + two INs.
    C3 = 16
    x3 = jax.random.normal(kx3, (1, C3, H, W), jnp.float32)
    p3 = _make_params(kp3, C3, C3)
    out3 = jax.block_until_ready(
        basic_block_pallas(x3, p3, dilation=1, residual=True,
                           matmul_dtype=jnp.bfloat16))
    ref3 = basic_block_ref(x3, p3, dilation=1, residual=True)
    np.testing.assert_allclose(np.asarray(out3), np.asarray(ref3),
                               rtol=5e-2, atol=1e-1)

    print("KERNEL_OK")
</pallas_src>

<mosaic_0001>
module attributes {stable_mosaic.version = 11 : i64} {
  func.func @kernel(%arg0: i32, %arg1: memref<8x256xf32, #tpu.memory_space<any>>, %arg2: memref<8x72xf32, #tpu.memory_space<vmem>>, %arg3: memref<8x72xf32, #tpu.memory_space<vmem>>, %arg4: memref<9x256xf32, #tpu.memory_space<vmem>>, %arg5: memref<8x256xf32, #tpu.memory_space<vmem>>, %arg6: memref<8x256xf32, #tpu.memory_space<vmem>>, %arg7: memref<72x256xf32, #tpu.memory_space<vmem>>, %arg8: memref<!tpu.dma_semaphore, #tpu.memory_space<semaphore_mem>>) attributes {dimension_semantics = [#tpu.dimension_semantics<arbitrary>], iteration_bounds = array<i64: 1>, scalar_prefetch = 0 : i64, scratch_operands = 3 : i64, tpu.core_type = #tpu.core_type<tc>, window_params = [{}, {pipeline_mode = #tpu.pipeline_mode<synchronous>, transform_indices = @transform_1, window_bounds = array<i64: 8, 72>}, {pipeline_mode = #tpu.pipeline_mode<synchronous>, transform_indices = @transform_2, window_bounds = array<i64: 8, 72>}, {pipeline_mode = #tpu.pipeline_mode<synchronous>, transform_indices = @transform_3, window_bounds = array<i64: 9, 256>}, {pipeline_mode = #tpu.pipeline_mode<synchronous>, transform_indices = @transform_4, window_bounds = array<i64: 8, 256>}]} {
    tpu.enqueue_dma source(%arg1 : memref<8x256xf32, #tpu.memory_space<any>>) target(%arg6 : memref<8x256xf32, #tpu.memory_space<vmem>>) target_semaphore(%arg8 : memref<!tpu.dma_semaphore, #tpu.memory_space<semaphore_mem>>)
    tpu.wait_dma2 semaphore(%arg8 : memref<!tpu.dma_semaphore, #tpu.memory_space<semaphore_mem>>) src(%arg1 : memref<8x256xf32, #tpu.memory_space<any>>) dst(%arg6 : memref<8x256xf32, #tpu.memory_space<vmem>>)
    %c0 = arith.constant 0 : index
    %c0_0 = arith.constant 0 : index
    %0 = vector.load %arg6[%c0, %c0_0] : memref<8x256xf32, #tpu.memory_space<vmem>>, vector<8x256xf32>
    %c17_i32 = arith.constant 17 : i32
    %1 = tpu.dynamic_rotate %0 by %c17_i32 dim 1 : vector<8x256xf32>, i32 -> vector<8x256xf32>
    %c0_1 = arith.constant 0 : index
    %c0_2 = arith.constant 0 : index
    %2 = vector.load %arg4[%c0_1, %c0_2] : memref<9x256xf32, #tpu.memory_space<vmem>>, vector<1x256xf32>
    %3 = vector.broadcast %2 : vector<1x256xf32> to vector<8x256xf32>
    %4 = arith.mulf %1, %3 : vector<8x256xf32>
    %c0_3 = arith.constant 0 : index
    %c0_4 = arith.constant 0 : index
    %5 = vector.load %arg7[%c0_3, %c0_4] : memref<72x256xf32, #tpu.memory_space<vmem>>, vector<8x256xf32>
    tpu.vector_store %arg7[%c0_3, %c0_4], %4 {strides = array<i32>} : memref<72x256xf32, #tpu.memory_space<vmem>>, vector<8x256xf32>,
    %c16_i32 = arith.constant 16 : i32
    %6 = tpu.dynamic_rotate %0 by %c16_i32 dim 1 : vector<8x256xf32>, i32 -> vector<8x256xf32>
    %c1 = arith.constant 1 : index
    %c0_5 = arith.constant 0 : index
    %7 = vector.load %arg4[%c1, %c0_5] : memref<9x256xf32, #tpu.memory_space<vmem>>, vector<1x256xf32>
    %8 = vector.broadcast %7 : vector<1x256xf32> to vector<8x256xf32>
    %9 = arith.mulf %6, %8 : vector<8x256xf32>
    %c8 = arith.constant 8 : index
    %c0_6 = arith.constant 0 : index
    %10 = vector.load %arg7[%c8, %c0_6] : memref<72x256xf32, #tpu.memory_space<vmem>>, vector<8x256xf32>
    tpu.vector_store %arg7[%c8, %c0_6], %9 {strides = array<i32>} : memref<72x256xf32, #tpu.memory_space<vmem>>, vector<8x256xf32>,
    %c15_i32 = arith.constant 15 : i32
    %11 = tpu.dynamic_rotate %0 by %c15_i32 dim 1 : vector<8x256xf32>, i32 -> vector<8x256xf32>
    %c2 = arith.constant 2 : index
    %c0_7 = arith.constant 0 : index
    %12 = vector.load %arg4[%c2, %c0_7] : memref<9x256xf32, #tpu.memory_space<vmem>>, vector<1x256xf32>
    %13 = vector.broadcast %12 : vector<1x256xf32> to vector<8x256xf32>
    %14 = arith.mulf %11, %13 : vector<8x256xf32>
    %c16 = arith.constant 16 : index
    %c0_8 = arith.constant 0 : index
    %15 = vector.load %arg7[%c16, %c0_8] : memref<72x256xf32, #tpu.memory_space<vmem>>, vector<8x256xf32>
    tpu.vector_store %arg7[%c16, %c0_8], %14 {strides = array<i32>} : memref<72x256xf32, #tpu.memory_space<vmem>>, vector<8x256xf32>,
    %c1_i32 = arith.constant 1 : i32
    %16 = tpu.dynamic_rotate %0 by %c1_i32 dim 1 : vector<8x256xf32>, i32 -> vector<8x256xf32>
    %c3 = arith.constant 3 : index
    %c0_9 = arith.constant 0 : index
    %17 = vector.load %arg4[%c3, %c0_9] : memref<9x256xf32, #tpu.memory_space<vmem>>, vector<1x256xf32>
    %18 = vector.broadcast %17 : vector<1x256xf32> to vector<8x256xf32>
    %19 = arith.mulf %16, %18 : vector<8x256xf32>
    %c24 = arith.constant 24 : index
    %c0_10 = arith.constant 0 : index
    %20 = vector.load %arg7[%c24, %c0_10] : memref<72x256xf32, #tpu.memory_space<vmem>>, vector<8x256xf32>
    tpu.vector_store %arg7[%c24, %c0_10], %19 {strides = array<i32>} : memref<72x256xf32, #tpu.memory_space<vmem>>, vector<8x256xf32>,
    %c32 = arith.constant 32 : index
    %c0_11 = arith.constant 0 : index
    %21 = vector.load %arg7[%c32, %c0_11] : memref<72x256xf32, #tpu.memory_space<vmem>>, vector<8x256xf32>
    tpu.vector_store %arg7[%c32, %c0_11], %0 {strides = array<i32>} : memref<72x256xf32, #tpu.memory_space<vmem>>, vector<8x256xf32>,
    %c255_i32 = arith.constant 255 : i32
    %22 = tpu.dynamic_rotate %0 by %c255_i32 dim 1 : vector<8x256xf32>, i32 -> vector<8x256xf32>
    %c5 = arith.constant 5 : index
    %c0_12 = arith.constant 0 : index
    %23 = vector.load %arg4[%c5, %c0_12] : memref<9x256xf32, #tpu.memory_space<vmem>>, vector<1x256xf32>
    %24 = vector.broadcast %23 : vector<1x256xf32> to vector<8x256xf32>
    %25 = arith.mulf %22, %24 : vector<8x256xf32>
    %c40 = arith.constant 40 : index
    %c0_13 = arith.constant 0 : index
    %26 = vector.load %arg7[%c40, %c0_13] : memref<72x256xf32, #tpu.memory_space<vmem>>, vector<8x256xf32>
    tpu.vector_store %arg7[%c40, %c0_13], %25 {strides = array<i32>} : memref<72x256xf32, #tpu.memory_space<vmem>>, vector<8x256xf32>,
    %c241_i32 = arith.constant 241 : i32
    %27 = tpu.dynamic_rotate %0 by %c241_i32 dim 1 : vector<8x256xf32>, i32 -> vector<8x256xf32>
    %c6 = arith.constant 6 : index
    %c0_14 = arith.constant 0 : index
    %28 = vector.load %arg4[%c6, %c0_14] : memref<9x256xf32, #tpu.memory_space<vmem>>, vector<1x256xf32>
    %29 = vector.broadcast %28 : vector<1x256xf32> to vector<8x256xf32>
    %30 = arith.mulf %27, %29 : vector<8x256xf32>
    %c48 = arith.constant 48 : index
    %c0_15 = arith.constant 0 : index
    %31 = vector.load %arg7[%c48, %c0_15] : memref<72x256xf32, #tpu.memory_space<vmem>>, vector<8x256xf32>
    tpu.vector_store %arg7[%c48, %c0_15], %30 {strides = array<i32>} : memref<72x256xf32, #tpu.memory_space<vmem>>, vector<8x256xf32>,
    %c240_i32 = arith.constant 240 : i32
    %32 = tpu.dynamic_rotate %0 by %c240_i32 dim 1 : vector<8x256xf32>, i32 -> vector<8x256xf32>
    %c7 = arith.constant 7 : index
    %c0_16 = arith.constant 0 : index
    %33 = vector.load %arg4[%c7, %c0_16] : memref<9x256xf32, #tpu.memory_space<vmem>>, vector<1x256xf32>
    %34 = vector.broadcast %33 : vector<1x256xf32> to vector<8x256xf32>
    %35 = arith.mulf %32, %34 : vector<8x256xf32>
    %c56 = arith.constant 56 : index
    %c0_17 = arith.constant 0 : index
    %36 = vector.load %arg7[%c56, %c0_17] : memref<72x256xf32, #tpu.memory_space<vmem>>, vector<8x256xf32>
    tpu.vector_store %arg7[%c56, %c0_17], %35 {strides = array<i32>} : memref<72x256xf32, #tpu.memory_space<vmem>>, vector<8x256xf32>,
    %c239_i32 = arith.constant 239 : i32
    %37 = tpu.dynamic_rotate %0 by %c239_i32 dim 1 : vector<8x256xf32>, i32 -> vector<8x256xf32>
    %c8_18 = arith.constant 8 : index
    %c0_19 = arith.constant 0 : index
    %38 = vector.load %arg4[%c8_18, %c0_19] : memref<9x256xf32, #tpu.memory_space<vmem>>, vector<1x256xf32>
    %39 = vector.broadcast %38 : vector<1x256xf32> to vector<8x256xf32>
    %40 = arith.mulf %37, %39 : vector<8x256xf32>
    %c64 = arith.constant 64 : index
    %c0_20 = arith.constant 0 : index
    %41 = vector.load %arg7[%c64, %c0_20] : memref<72x256xf32, #tpu.memory_space<vmem>>, vector<8x256xf32>
    tpu.vector_store %arg7[%c64, %c0_20], %40 {strides = array<i32>} : memref<72x256xf32, #tpu.memory_space<vmem>>, vector<8x256xf32>,
    %c0_21 = arith.constant 0 : index
    %c0_22 = arith.constant 0 : index
    %42 = vector.load %arg2[%c0_21, %c0_22] : memref<8x72xf32, #tpu.memory_space<vmem>>, vector<8x72xf32>
    %c0_23 = arith.constant 0 : index
    %c0_24 = arith.constant 0 : index
    %43 = vector.load %arg7[%c0_23, %c0_24] : memref<72x256xf32, #tpu.memory_space<vmem>>, vector<72x256xf32>
    %cst = arith.constant dense<0.000000e+00> : vector<8x256xf32>
    %44 = tpu.matmul %42, %43, %cst {dimension_numbers = #tpu.dot_dimension_numbers<[1], [0], [0], [1], [0, 0, 1, 1], [], []>} : vector<8x72xf32>, vector<72x256xf32>, vector<8x256xf32> -> vector<8x256xf32>
    %cst_25 = arith.constant dense<0.000000e+00> : vector<8xf32>
    %45 = vector.multi_reduction <add>, %44, %cst_25 [1] : vector<8x256xf32> to vector<8xf32>
    %46 = vector.shape_cast %45 : vector<8xf32> to vector<8x1xf32>
    %cst_26 = arith.constant 3.906250e-03 : f32
    %47 = vector.broadcast %cst_26 : f32 to vector<8x1xf32>
    %48 = arith.mulf %46, %47 : vector<8x1xf32>
    %49 = vector.broadcast %48 : vector<8x1xf32> to vector<8x256xf32>
    %50 = arith.subf %44, %49 : vector<8x256xf32>
    %51 = arith.mulf %50, %50 : vector<8x256xf32>
    %cst_27 = arith.constant dense<0.000000e+00> : vector<8xf32>
    %52 = vector.multi_reduction <add>, %51, %cst_27 [1] : vector<8x256xf32> to vector<8xf32>
    %53 = vector.shape_cast %52 : vector<8xf32> to vector<8x1xf32>
    %cst_28 = arith.constant 3.906250e-03 : f32
    %54 = vector.broadcast %cst_28 : f32 to vector<8x1xf32>
    %55 = arith.mulf %53, %54 : vector<8x1xf32>
    %cst_29 = arith.constant 9.99999974E-6 : f32
    %56 = vector.broadcast %cst_29 : f32 to vector<8x1xf32>
    %57 = arith.addf %55, %56 : vector<8x1xf32>
    %58 = math.rsqrt %57 : vector<8x1xf32>
    %59 = vector.broadcast %58 : vector<8x1xf32> to vector<8x256xf32>
    %60 = arith.mulf %50, %59 : vector<8x256xf32>
    %cst_30 = arith.constant 0.000000e+00 : f32
    %61 = vector.broadcast %cst_30 : f32 to vector<8x256xf32>
    %62 = arith.maximumf %60, %61 : vector<8x256xf32>
    %c17_i32_31 = arith.constant 17 : i32
    %63 = tpu.dynamic_rotate %62 by %c17_i32_31 dim 1 : vector<8x256xf32>, i32 -> vector<8x256xf32>
    %c0_32 = arith.constant 0 : index
    %c0_33 = arith.constant 0 : index
    %64 = vector.load %arg4[%c0_32, %c0_33] : memref<9x256xf32, #tpu.memory_space<vmem>>, vector<1x256xf32>
    %65 = vector.broadcast %64 : vector<1x256xf32> to vector<8x256xf32>
    %66 = arith.mulf %63, %65 : vector<8x256xf32>
    %c0_34 = arith.constant 0 : index
    %c0_35 = arith.constant 0 : index
    %67 = vector.load %arg7[%c0_34, %c0_35] : memref<72x256xf32, #tpu.memory_space<vmem>>, vector<8x256xf32>
    tpu.vector_store %arg7[%c0_34, %c0_35], %66 {strides = array<i32>} : memref<72x256xf32, #tpu.memory_space<vmem>>, vector<8x256xf32>,
    %c16_i32_36 = arith.constant 16 : i32
    %68 = tpu.dynamic_rotate %62 by %c16_i32_36 dim 1 : vector<8x256xf32>, i32 -> vector<8x256xf32>
    %c1_37 = arith.constant 1 : index
    %c0_38 = arith.constant 0 : index
    %69 = vector.load %arg4[%c1_37, %c0_38] : memref<9x256xf32, #tpu.memory_space<vmem>>, vector<1x256xf32>
    %70 = vector.broadcast %69 : vector<1x256xf32> to vector<8x256xf32>
    %71 = arith.mulf %68, %70 : vector<8x256xf32>
    %c8_39 = arith.constant 8 : index
    %c0_40 = arith.constant 0 : index
    %72 = vector.load %arg7[%c8_39, %c0_40] : memref<72x256xf32, #tpu.memory_space<vmem>>, vector<8x256xf32>
    tpu.vector_store %arg7[%c8_39, %c0_40], %71 {strides = array<i32>} : memref<72x256xf32, #tpu.memory_space<vmem>>, vector<8x256xf32>,
    %c15_i32_41 = arith.constant 15 : i32
    %73 = tpu.dynamic_rotate %62 by %c15_i32_41 dim 1 : vector<8x256xf32>, i32 -> vector<8x256xf32>
    %c2_42 = arith.constant 2 : index
    %c0_43 = arith.constant 0 : index
    %74 = vector.load %arg4[%c2_42, %c0_43] : memref<9x256xf32, #tpu.memory_space<vmem>>, vector<1x256xf32>
    %75 = vector.broadcast %74 : vector<1x256xf32> to vector<8x256xf32>
    %76 = arith.mulf %73, %75 : vector<8x256xf32>
    %c16_44 = arith.constant 16 : index
    %c0_45 = arith.constant 0 : index
    %77 = vector.load %arg7[%c16_44, %c0_45] : memref<72x256xf32, #tpu.memory_space<vmem>>, vector<8x256xf32>
    tpu.vector_store %arg7[%c16_44, %c0_45], %76 {strides = array<i32>} : memref<72x256xf32, #tpu.memory_space<vmem>>, vector<8x256xf32>,
    %c1_i32_46 = arith.constant 1 : i32
    %78 = tpu.dynamic_rotate %62 by %c1_i32_46 dim 1 : vector<8x256xf32>, i32 -> vector<8x256xf32>
    %c3_47 = arith.constant 3 : index
    %c0_48 = arith.constant 0 : index
    %79 = vector.load %arg4[%c3_47, %c0_48] : memref<9x256xf32, #tpu.memory_space<vmem>>, vector<1x256xf32>
    %80 = vector.broadcast %79 : vector<1x256xf32> to vector<8x256xf32>
    %81 = arith.mulf %78, %80 : vector<8x256xf32>
    %c24_49 = arith.constant 24 : index
    %c0_50 = arith.constant 0 : index
    %82 = vector.load %arg7[%c24_49, %c0_50] : memref<72x256xf32, #tpu.memory_space<vmem>>, vector<8x256xf32>
    tpu.vector_store %arg7[%c24_49, %c0_50], %81 {strides = array<i32>} : memref<72x256xf32, #tpu.memory_space<vmem>>, vector<8x256xf32>,
    %c32_51 = arith.constant 32 : index
    %c0_52 = arith.constant 0 : index
    %83 = vector.load %arg7[%c32_51, %c0_52] : memref<72x256xf32, #tpu.memory_space<vmem>>, vector<8x256xf32>
    tpu.vector_store %arg7[%c32_51, %c0_52], %62 {strides = array<i32>} : memref<72x256xf32, #tpu.memory_space<vmem>>, vector<8x256xf32>,
    %c255_i32_53 = arith.constant 255 : i32
    %84 = tpu.dynamic_rotate %62 by %c255_i32_53 dim 1 : vector<8x256xf32>, i32 -> vector<8x256xf32>
    %c5_54 = arith.constant 5 : index
    %c0_55 = arith.constant 0 : index
    %85 = vector.load %arg4[%c5_54, %c0_55] : memref<9x256xf32, #tpu.memory_space<vmem>>, vector<1x256xf32>
    %86 = vector.broadcast %85 : vector<1x256xf32> to vector<8x256xf32>
    %87 = arith.mulf %84, %86 : vector<8x256xf32>
    %c40_56 = arith.constant 40 : index
    %c0_57 = arith.constant 0 : index
    %88 = vector.load %arg7[%c40_56, %c0_57] : memref<72x256xf32, #tpu.memory_space<vmem>>, vector<8x256xf32>
    tpu.vector_store %arg7[%c40_56, %c0_57], %87 {strides = array<i32>} : memref<72x256xf32, #tpu.memory_space<vmem>>, vector<8x256xf32>,
    %c241_i32_58 = arith.constant 241 : i32
    %89 = tpu.dynamic_rotate %62 by %c241_i32_58 dim 1 : vector<8x256xf32>, i32 -> vector<8x256xf32>
    %c6_59 = arith.constant 6 : index
    %c0_60 = arith.constant 0 : index
    %90 = vector.load %arg4[%c6_59, %c0_60] : memref<9x256xf32, #tpu.memory_space<vmem>>, vector<1x256xf32>
    %91 = vector.broadcast %90 : vector<1x256xf32> to vector<8x256xf32>
    %92 = arith.mulf %89, %91 : vector<8x256xf32>
    %c48_61 = arith.constant 48 : index
    %c0_62 = arith.constant 0 : index
    %93 = vector.load %arg7[%c48_61, %c0_62] : memref<72x256xf32, #tpu.memory_space<vmem>>, vector<8x256xf32>
    tpu.vector_store %arg7[%c48_61, %c0_62], %92 {strides = array<i32>} : memref<72x256xf32, #tpu.memory_space<vmem>>, vector<8x256xf32>,
    %c240_i32_63 = arith.constant 240 : i32
    %94 = tpu.dynamic_rotate %62 by %c240_i32_63 dim 1 : vector<8x256xf32>, i32 -> vector<8x256xf32>
    %c7_64 = arith.constant 7 : index
    %c0_65 = arith.constant 0 : index
    %95 = vector.load %arg4[%c7_64, %c0_65] : memref<9x256xf32, #tpu.memory_space<vmem>>, vector<1x256xf32>
    %96 = vector.broadcast %95 : vector<1x256xf32> to vector<8x256xf32>
    %97 = arith.mulf %94, %96 : vector<8x256xf32>
    %c56_66 = arith.constant 56 : index
    %c0_67 = arith.constant 0 : index
    %98 = vector.load %arg7[%c56_66, %c0_67] : memref<72x256xf32, #tpu.memory_space<vmem>>, vector<8x256xf32>
    tpu.vector_store %arg7[%c56_66, %c0_67], %97 {strides = array<i32>} : memref<72x256xf32, #tpu.memory_space<vmem>>, vector<8x256xf32>,
    %c239_i32_68 = arith.constant 239 : i32
    %99 = tpu.dynamic_rotate %62 by %c239_i32_68 dim 1 : vector<8x256xf32>, i32 -> vector<8x256xf32>
    %c8_69 = arith.constant 8 : index
    %c0_70 = arith.constant 0 : index
    %100 = vector.load %arg4[%c8_69, %c0_70] : memref<9x256xf32, #tpu.memory_space<vmem>>, vector<1x256xf32>
    %101 = vector.broadcast %100 : vector<1x256xf32> to vector<8x256xf32>
    %102 = arith.mulf %99, %101 : vector<8x256xf32>
    %c64_71 = arith.constant 64 : index
    %c0_72 = arith.constant 0 : index
    %103 = vector.load %arg7[%c64_71, %c0_72] : memref<72x256xf32, #tpu.memory_space<vmem>>, vector<8x256xf32>
    tpu.vector_store %arg7[%c64_71, %c0_72], %102 {strides = array<i32>} : memref<72x256xf32, #tpu.memory_space<vmem>>, vector<8x256xf32>,
    %c0_73 = arith.constant 0 : index
    %c0_74 = arith.constant 0 : index
    %104 = vector.load %arg3[%c0_73, %c0_74] : memref<8x72xf32, #tpu.memory_space<vmem>>, vector<8x72xf32>
    %c0_75 = arith.constant 0 : index
    %c0_76 = arith.constant 0 : index
    %105 = vector.load %arg7[%c0_75, %c0_76] : memref<72x256xf32, #tpu.memory_space<vmem>>, vector<72x256xf32>
    %cst_77 = arith.constant dense<0.000000e+00> : vector<8x256xf32>
    %106 = tpu.matmul %104, %105, %cst_77 {dimension_numbers = #tpu.dot_dimension_numbers<[1], [0], [0], [1], [0, 0, 1, 1], [], []>} : vector<8x72xf32>, vector<72x256xf32>, vector<8x256xf32> -> vector<8x256xf32>
    %cst_78 = arith.constant dense<0.000000e+00> : vector<8xf32>
    %107 = vector.multi_reduction <add>, %106, %cst_78 [1] : vector<8x256xf32> to vector<8xf32>
    %108 = vector.shape_cast %107 : vector<8xf32> to vector<8x1xf32>
    %cst_79 = arith.constant 3.906250e-03 : f32
    %109 = vector.broadcast %cst_79 : f32 to vector<8x1xf32>
    %110 = arith.mulf %108, %109 : vector<8x1xf32>
    %111 = vector.broadcast %110 : vector<8x1xf32> to vector<8x256xf32>
    %112 = arith.subf %106, %111 : vector<8x256xf32>
    %113 = arith.mulf %112, %112 : vector<8x256xf32>
    %cst_80 = arith.constant dense<0.000000e+00> : vector<8xf32>
    %114 = vector.multi_reduction <add>, %113, %cst_80 [1] : vector<8x256xf32> to vector<8xf32>
    %115 = vector.shape_cast %114 : vector<8xf32> to vector<8x1xf32>
    %cst_81 = arith.constant 3.906250e-03 : f32
    %116 = vector.broadcast %cst_81 : f32 to vector<8x1xf32>
    %117 = arith.mulf %115, %116 : vector<8x1xf32>
    %cst_82 = arith.constant 9.99999974E-6 : f32
    %118 = vector.broadcast %cst_82 : f32 to vector<8x1xf32>
    %119 = arith.addf %117, %118 : vector<8x1xf32>
    %120 = math.rsqrt %119 : vector<8x1xf32>
    %121 = vector.broadcast %120 : vector<8x1xf32> to vector<8x256xf32>
    %122 = arith.mulf %112, %121 : vector<8x256xf32>
    %123 = arith.addf %122, %0 : vector<8x256xf32>
    %cst_83 = arith.constant 0.000000e+00 : f32
    %124 = vector.broadcast %cst_83 : f32 to vector<8x256xf32>
    %125 = arith.maximumf %123, %124 : vector<8x256xf32>
    %c0_84 = arith.constant 0 : index
    %c0_85 = arith.constant 0 : index
    %126 = vector.load %arg5[%c0_84, %c0_85] : memref<8x256xf32, #tpu.memory_space<vmem>>, vector<8x256xf32>
    tpu.vector_store %arg5[%c0_84, %c0_85], %125 {strides = array<i32>} : memref<8x256xf32, #tpu.memory_space<vmem>>, vector<8x256xf32>,
    return
  }
  func.func @transform_1(%arg0: i32) -> (i32, i32) {
    %c0_i32 = arith.constant 0 : i32
    %c0_i32_0 = arith.constant 0 : i32
    %c0_i32_1 = arith.constant 0 : i32
    return %c0_i32, %c0_i32_0 : i32, i32
  }
  func.func @transform_2(%arg0: i32) -> (i32, i32) {
    %c0_i32 = arith.constant 0 : i32
    %c0_i32_0 = arith.constant 0 : i32
    %c0_i32_1 = arith.constant 0 : i32
    return %c0_i32, %c0_i32_0 : i32, i32
  }
  func.func @transform_3(%arg0: i32) -> (i32, i32) {
    %c0_i32 = arith.constant 0 : i32
    %c0_i32_0 = arith.constant 0 : i32
    %c0_i32_1 = arith.constant 0 : i32
    return %c0_i32, %c0_i32_0 : i32, i32
  }
  func.func @transform_4(%arg0: i32) -> (i32, i32) {
    %c0_i32 = arith.constant 0 : i32
    %c0_i32_0 = arith.constant 0 : i32
    %c0_i32_1 = arith.constant 0 : i32
    return %c0_i32, %c0_i32_0 : i32, i32
  }
}

</mosaic_0001>

<llo_original>
// kernel: tpu_custom_call.1
$region0: #{tpu_custom_call.1}
  #allocation0 [shape = 'u32[]', space=smem, size = 0x4, offset = 0x4, fixed_abs, tag = 'smem constant byte address 0x4 - core index']
  #allocation1 [shape = 'u32[144,128]{1,0:T(1,128)}', space=vmem, size = 0x12000, scoped, tag = 'internal scratch']
  #allocation2 [shape = 'f32[8,256]{1,0:T(8,128)}', space=vmem, size = 0x2000, scoped, tag = 'scratch operand']
  #allocation3 [shape = 'f32[72,256]{1,0:T(8,128)}', space=vmem, size = 0x12000, scoped, tag = 'scratch operand']
  #allocation4 [shape = 's32[1]{0}', space=sflag, size = 0x4, scoped, tag = 'scratch operand']
  #allocation12 [shape = 's32[]', space=sflag, size = 0x4, offset = 0, fixed_abs, tag = 'sflag constant byte address 0x0 - dummy sync flag']
  #allocation13 [shape = 's32[]', space=sflag, size = 0x4, offset = 0, fixed_abs, tag = 'sflag constant byte address 0x0 - dummy sync flag']
  #allocation14 [shape = 'u32[]', space=smem, size = 0x4, offset = 0x44, fixed_abs, tag = 'smem constant byte address 0x44 - assertion arg 0']
  #allocation15 [shape = 'u32[]', space=smem, size = 0x4, offset = 0x48, fixed_abs, tag = 'smem constant byte address 0x48 - assertion arg 1']
  %s0 = inlined_call_operand.hbm [shape: f32[8,256], index: 0, kind: input, shape index: {}]
  %s1 = inlined_call_operand.hbm [shape: f32[8,72], index: 1, kind: input, shape index: {}]
  %s2 = inlined_call_operand.hbm [shape: f32[8,72], index: 2, kind: input, shape index: {}]
  %s3 = inlined_call_operand.hbm [shape: f32[9,256], index: 3, kind: input, shape index: {}]
  %s4 = inlined_call_operand.hbm [shape: f32[8,256], index: 4, kind: output, shape index: {}]
  %s5 = sld [smem:[#allocation0]]
  $region38: #{tpu_custom_call.1} parent=0
    _
  %s7 = ssub.s32 1, %s5
  %s8 = scalar_select 0, %s7, %s5
  $region1: #{tpu_custom_call.1} parent=0
    #allocation5 [shape = 'u8[4096]{0}', space=vmem, size = 0x1000, scoped, tag = 'input window, operand 1, single buffered']
    #allocation6 [shape = 's32[1]{0}', space=sflag, size = 0x4, scoped, tag = 'scoped memory for tpu_custom_call.1']
    #allocation7 [shape = 's32[1]{0}', space=sflag, size = 0x4, scoped, tag = 'scoped memory for tpu_custom_call.1']
    #allocation8 [shape = 'u8[4096]{0}', space=vmem, size = 0x1000, scoped, tag = 'input window, operand 2, single buffered']
    #allocation9 [shape = 's32[1]{0}', space=sflag, size = 0x4, scoped, tag = 'scoped memory for tpu_custom_call.1']
    #allocation10 [shape = 'u8[16384]{0}', space=vmem, size = 0x4000, scoped, tag = 'input window, operand 3, single buffered']
    #allocation11 [shape = 'u8[8192]{0}', space=vmem, size = 0x2000, scoped, tag = 'output window, operand 0, single buffered']
    %9 = vsyncpa [#allocation6], 0
    %10 = vsyncpa [#allocation9], 0
    %11 = vsyncpa [#allocation7], 0
    // Predicated region
    $region2: #{tpu_custom_call.1} parent=1 // pred_check
      _
    $region3: #{tpu_custom_call.1} parent=1 // pred_check_branch
      %13 = sbr.rel (0) target = $region5
    $region4: #{tpu_custom_call.1} parent=1 // pred_region
      %s15 = ssub.s32 128, 128
      %16 = vsyncadd [#allocation6], %s15
      %s18 = sshll.u32 [#allocation5], 4
      %s19 = int_to_ptr.vmem [resolvable:$true] %s18
      %21 = dma.hbm_to_vmem [thread:$0]  %s1, 128, %s19, [#allocation6]
    $region5: #{tpu_custom_call.1} parent=1 // pred_fallthru
      _
    // Predicated region
    $region6: #{tpu_custom_call.1} parent=1 // pred_check
      _
    $region7: #{tpu_custom_call.1} parent=1 // pred_check_branch
      %23 = sbr.rel (0) target = $region9
    $region8: #{tpu_custom_call.1} parent=1 // pred_region
      %s25 = ssub.s32 128, 128
      %26 = vsyncadd [#allocation9], %s25
      %s28 = sshll.u32 [#allocation8], 4
      %s29 = int_to_ptr.vmem [resolvable:$true] %s28
      %31 = dma.hbm_to_vmem [thread:$0]  %s2, 128, %s29, [#allocation9]
    $region9: #{tpu_custom_call.1} parent=1 // pred_fallthru
      _
    // Predicated region
    $region10: #{tpu_custom_call.1} parent=1 // pred_check
      _
    $region11: #{tpu_custom_call.1} parent=1 // pred_check_branch
      %33 = sbr.rel (0) target = $region13
    $region12: #{tpu_custom_call.1} parent=1 // pred_region
      %s35 = ssub.s32 512, 512
      %36 = vsyncadd [#allocation9], %s35
      %s37 = sshll.u32 [#allocation10], 4
      %s38 = int_to_ptr.vmem [resolvable:$true] %s37
      %43 = dma.hbm_to_vmem [thread:$0]  %s3, 512, %s38, [#allocation9], 256, 256, 16
    $region13: #{tpu_custom_call.1} parent=1 // pred_fallthru
      _
    // Predicated region
    $region14: #{tpu_custom_call.1} parent=1 // pred_check
      _
    $region15: #{tpu_custom_call.1} parent=1 // pred_check_branch
      %45 = sbr.rel (0) target = $region17
    $region16: #{tpu_custom_call.1} parent=1 // pred_region
      %46 = dma.done [#allocation6], 128
    $region17: #{tpu_custom_call.1} parent=1 // pred_fallthru
      _
    // Predicated region
    $region18: #{tpu_custom_call.1} parent=1 // pred_check
      _
    $region19: #{tpu_custom_call.1} parent=1 // pred_check_branch
      %48 = sbr.rel (0) target = $region21
    $region20: #{tpu_custom_call.1} parent=1 // pred_region
      %49 = dma.done [#allocation9], 128
    $region21: #{tpu_custom_call.1} parent=1 // pred_fallthru
      _
    // Predicated region
    $region22: #{tpu_custom_call.1} parent=1 // pred_check
      _
    $region23: #{tpu_custom_call.1} parent=1 // pred_check_branch
      %51 = sbr.rel (0) target = $region25
    $region24: #{tpu_custom_call.1} parent=1 // pred_region
      %52 = dma.done [#allocation9], 512
    $region25: #{tpu_custom_call.1} parent=1 // pred_fallthru
      _
    // Predicated region
    $region26: #{tpu_custom_call.1} parent=1 // pred_check
      _
    $region27: #{tpu_custom_call.1} parent=1 // pred_check_branch
      %54 = sbr.rel target = $region29
    $region28: #{tpu_custom_call.1} parent=1 // pred_region
      %55 = sst [smem:[#allocation14]] [#allocation13]
      %56 = sst [smem:[#allocation15]] [#allocation12]
    $region29: #{tpu_custom_call.1} parent=1 // pred_fallthru
      _
    %58 = shalt.err (0)
    %s60 = sshll.u32 [#allocation2], 4
    %s61 = int_to_ptr.vmem [resolvable:$true] %s60
    %63 = dma.hbm_to_vmem [thread:$0]  %s0, 256, %s61, [#allocation4]
    %s64 = smul.u32 8, 1
    %s65 = smul.u32 %s64, 2
    %s66 = sshll.u32 %s65, 4
    %67 = dma.done [#allocation4], %s66
    %v68 = vld [vmem:[#allocation2] sm:$0xff]
    %v69 = vld [vmem:[#allocation2 + $0x8] sm:$0xff]
    %70 = vrot.lane.b32.xlu0 %v68, 17
    %v71 = vpop.permute.xlu0 %70
    %72 = vrot.lane.b32.xlu0 %v69, 17
    %v73 = vpop.permute.xlu0 %72
    %v74 = vlaneseq
    %v75 = vand.u32 %v74, 127
    %vm76 = vcmp.lt.s32.totalorder %v75, 17
    %v77 = vsel %vm76, %v71, %v73
    %v78 = vsel %vm76, %v73, %v71
    %v79 = vld [vmem:[#allocation10] ss:$8 sm:$0x3]
    %v81 = vlaneseq
    %v82 = vshrl.u32 %v81, 7
    %v83 = vsub.s32 0, %v82
    %v84 = vrot.slane %v79, %v83
    %v85 = vlaneseq
    %v86 = vshrl.u32 %v85, 7
    %v87 = vsub.s32 1, %v86
    %v88 = vrot.slane %v79, %v87
    %v91 = vmul.f32 %v78, %v84
    %v92 = vmul.f32 %v77, %v88
    %93 = vst [vmem:[#allocation3] sm:$0xff] %v91
    %94 = vst [vmem:[#allocation3 + $0x8] sm:$0xff] %v92
    %95 = vrot.lane.b32.xlu0 %v68, 16
    %v96 = vpop.permute.xlu0 %95
    %97 = vrot.lane.b32.xlu0 %v69, 16
    %v98 = vpop.permute.xlu0 %97
    %vm99 = vcmp.lt.s32.totalorder %v75, 16
    %v100 = vsel %vm99, %v96, %v98
    %v101 = vsel %vm99, %v98, %v96
    %s102 = scalar_lea.vmem [#allocation10], 1
    %v103 = vld [vmem:[%s102] ss:$8 sm:$0x3]
    %v105 = vlaneseq
    %v106 = vshrl.u32 %v105, 7
    %v107 = vsub.s32 0, %v106
    %v108 = vrot.slane %v103, %v107
    %v109 = vlaneseq
    %v110 = vshrl.u32 %v109, 7
    %v111 = vsub.s32 1, %v110
    %v112 = vrot.slane %v103, %v111
    %v115 = vmul.f32 %v101, %v108
    %v116 = vmul.f32 %v100, %v112
    %117 = vst [vmem:[#allocation3 + $0x10] sm:$0xff] %v115
    %118 = vst [vmem:[#allocation3 + $0x18] sm:$0xff] %v116
    %119 = vrot.lane.b32.xlu0 %v68, 15
    %v120 = vpop.permute.xlu0 %119
    %121 = vrot.lane.b32.xlu0 %v69, 15
    %v122 = vpop.permute.xlu0 %121
    %vm123 = vcmp.lt.s32.totalorder %v75, 15
    %v124 = vsel %vm123, %v120, %v122
    %v125 = vsel %vm123, %v122, %v120
    %s126 = scalar_lea.vmem [#allocation10], 2
    %v127 = vld [vmem:[%s126] ss:$8 sm:$0x3]
    %v129 = vlaneseq
    %v130 = vshrl.u32 %v129, 7
    %v131 = vsub.s32 0, %v130
    %v132 = vrot.slane %v127, %v131
    %v133 = vlaneseq
    %v134 = vshrl.u32 %v133, 7
    %v135 = vsub.s32 1, %v134
    %v136 = vrot.slane %v127, %v135
    %v139 = vmul.f32 %v125, %v132
    %v140 = vmul.f32 %v124, %v136
    %141 = vst [vmem:[#allocation3 + $0x20] sm:$0xff] %v139
    %142 = vst [vmem:[#allocation3 + $0x28] sm:$0xff] %v140
    %143 = vrot.lane.b32.xlu0 %v68, 1
    %v144 = vpop.permute.xlu0 %143
    %145 = vrot.lane.b32.xlu0 %v69, 1
    %v146 = vpop.permute.xlu0 %145
    %vm147 = vcmp.lt.s32.totalorder %v75, 1
    %v148 = vsel %vm147, %v144, %v146
    %v149 = vsel %vm147, %v146, %v144
    %s150 = scalar_lea.vmem [#allocation10], 3
    %v151 = vld [vmem:[%s150] ss:$8 sm:$0x3]
    %v153 = vlaneseq
    %v154 = vshrl.u32 %v153, 7
    %v155 = vsub.s32 0, %v154
    %v156 = vrot.slane %v151, %v155
    %v157 = vlaneseq
    %v158 = vshrl.u32 %v157, 7
    %v159 = vsub.s32 1, %v158
    %v160 = vrot.slane %v151, %v159
    %v163 = vmul.f32 %v149, %v156
    %v164 = vmul.f32 %v148, %v160
    %165 = vst [vmem:[#allocation3 + $0x30] sm:$0xff] %v163
    %166 = vst [vmem:[#allocation3 + $0x38] sm:$0xff] %v164
    %167 = vst [vmem:[#allocation3 + $0x40] sm:$0xff] %v68
    %168 = vst [vmem:[#allocation3 + $0x48] sm:$0xff] %v69
    %169 = vrot.lane.b32.xlu0 %v68, 127
    %v170 = vpop.permute.xlu0 %169
    %171 = vrot.lane.b32.xlu0 %v69, 127
    %v172 = vpop.permute.xlu0 %171
    %vm173 = vcmp.lt.s32.totalorder %v75, 127
    %v174 = vsel %vm173, %v170, %v172
    %v175 = vsel %vm173, %v172, %v170
    %s176 = scalar_lea.vmem [#allocation10], 5
    %v177 = vld [vmem:[%s176] ss:$8 sm:$0x3]
    %v179 = vlaneseq
    %v180 = vshrl.u32 %v179, 7
    %v181 = vsub.s32 0, %v180
    %v182 = vrot.slane %v177, %v181
    %v183 = vlaneseq
    %v184 = vshrl.u32 %v183, 7
    %v185 = vsub.s32 1, %v184
    %v186 = vrot.slane %v177, %v185
    %v189 = vmul.f32 %v174, %v182
    %v190 = vmul.f32 %v175, %v186
    %191 = vst [vmem:[#allocation3 + $0x50] sm:$0xff] %v189
    %192 = vst [vmem:[#allocation3 + $0x58] sm:$0xff] %v190
    %193 = vrot.lane.b32.xlu0 %v68, 113
    %v194 = vpop.permute.xlu0 %193
    %195 = vrot.lane.b32.xlu0 %v69, 113
    %v196 = vpop.permute.xlu0 %195
    %vm197 = vcmp.lt.s32.totalorder %v75, 113
    %v198 = vsel %vm197, %v194, %v196
    %v199 = vsel %vm197, %v196, %v194
    %s200 = scalar_lea.vmem [#allocation10], 6
    %v201 = vld [vmem:[%s200] ss:$8 sm:$0x3]
    %v203 = vlaneseq
    %v204 = vshrl.u32 %v203, 7
    %v205 = vsub.s32 0, %v204
    %v206 = vrot.slane %v201, %v205
    %v207 = vlaneseq
    %v208 = vshrl.u32 %v207, 7
    %v209 = vsub.s32 1, %v208
    %v210 = vrot.slane %v201, %v209
    %v213 = vmul.f32 %v198, %v206
    %v214 = vmul.f32 %v199, %v210
    %215 = vst [vmem:[#allocation3 + $0x60] sm:$0xff] %v213
    %216 = vst [vmem:[#allocation3 + $0x68] sm:$0xff] %v214
    %217 = vrot.lane.b32.xlu0 %v68, 112
    %v218 = vpop.permute.xlu0 %217
    %219 = vrot.lane.b32.xlu0 %v69, 112
    %v220 = vpop.permute.xlu0 %219
    %vm221 = vcmp.lt.s32.totalorder %v75, 112
    %v222 = vsel %vm221, %v218, %v220
    %v223 = vsel %vm221, %v220, %v218
    %s224 = scalar_lea.vmem [#allocation10], 7
    %v225 = vld [vmem:[%s224] ss:$8 sm:$0x3]
    %v227 = vlaneseq
    %v228 = vshrl.u32 %v227, 7
    %v229 = vsub.s32 0, %v228
    %v230 = vrot.slane %v225, %v229
    %v231 = vlaneseq
    %v232 = vshrl.u32 %v231, 7
    %v233 = vsub.s32 1, %v232
    %v234 = vrot.slane %v225, %v233
    %v237 = vmul.f32 %v222, %v230
    %v238 = vmul.f32 %v223, %v234
    %239 = vst [vmem:[#allocation3 + $0x70] sm:$0xff] %v237
    %240 = vst [vmem:[#allocation3 + $0x78] sm:$0xff] %v238
    %241 = vrot.lane.b32.xlu0 %v68, 111
    %v242 = vpop.permute.xlu0 %241
    %243 = vrot.lane.b32.xlu0 %v69, 111
    %v244 = vpop.permute.xlu0 %243
    %vm245 = vcmp.lt.s32.totalorder %v75, 111
    %v246 = vsel %vm245, %v242, %v244
    %v247 = vsel %vm245, %v244, %v242
    %s248 = scalar_lea.vmem [#allocation10], 16
    %v249 = vld [vmem:[%s248] ss:$8 sm:$0x3]
    %v251 = vlaneseq
    %v252 = vshrl.u32 %v251, 7
    %v253 = vsub.s32 0, %v252
    %v254 = vrot.slane %v249, %v253
    %v255 = vlaneseq
    %v256 = vshrl.u32 %v255, 7
    %v257 = vsub.s32 1, %v256
    %v258 = vrot.slane %v249, %v257
    %v261 = vmul.f32 %v246, %v254
    %v262 = vmul.f32 %v247, %v258
    %263 = vst [vmem:[#allocation3 + $0x80] sm:$0xff] %v261
    %264 = vst [vmem:[#allocation3 + $0x88] sm:$0xff] %v262
    %v265 = vld [vmem:[#allocation5] sm:$0xff]
    %v266 = vld [vmem:[#allocation3] sm:$0xff]
    %v267 = vld [vmem:[#allocation3 + $0x8] sm:$0xff]
    %v268 = vld [vmem:[#allocation3 + $0x10] sm:$0xff]
    %v269 = vld [vmem:[#allocation3 + $0x18] sm:$0xff]
    %v270 = vld [vmem:[#allocation3 + $0x20] sm:$0xff]
    %v271 = vld [vmem:[#allocation3 + $0x28] sm:$0xff]
    %v272 = vld [vmem:[#allocation3 + $0x30] sm:$0xff]
    %v273 = vld [vmem:[#allocation3 + $0x38] sm:$0xff]
    %v274 = vld [vmem:[#allocation3 + $0x40] sm:$0xff]
    %v275 = vld [vmem:[#allocation3 + $0x48] sm:$0xff]
    %v276 = vld [vmem:[#allocation3 + $0x50] sm:$0xff]
    %v277 = vld [vmem:[#allocation3 + $0x58] sm:$0xff]
    %v278 = vld [vmem:[#allocation3 + $0x60] sm:$0xff]
    %v279 = vld [vmem:[#allocation3 + $0x68] sm:$0xff]
    %v280 = vld [vmem:[#allocation3 + $0x70] sm:$0xff]
    %v281 = vld [vmem:[#allocation3 + $0x78] sm:$0xff]
    %v282 = vld [vmem:[#allocation3 + $0x80] sm:$0xff]
    %v283 = vld [vmem:[#allocation3 + $0x88] sm:$0xff]
    %vm284 = vcmask 588800
    %v286 = vsel %vm284, %v265, 0
    %288 = vmatprep.subr.mxu0 %v267
    %289 = vmatpush1.msra.mxu0 %v266
    %290 = vmatprep.subr.mxu0 %v269
    %291 = vmatpush1.msra.mxu0 %v268
    %292 = vmatprep.subr.mxu0 %v271
    %293 = vmatpush1.msra.mxu0 %v270
    %294 = vmatprep.subr.mxu0 %v273
    %295 = vmatpush1.msra.mxu0 %v272
    %296 = vmatprep.subr.mxu0 %v275
    %297 = vmatpush1.msra.mxu0 %v274
    %298 = vmatprep.subr.mxu0 %v277
    %299 = vmatpush1.msra.mxu0 %v276
    %300 = vmatprep.subr.mxu0 %v279
    %301 = vmatpush1.msra.mxu0 %v278
    %302 = vmatprep.subr.mxu0 %v281
    %303 = vmatpush1.msra.mxu0 %v280
    %304 = vmatprep.subr.mxu0 %v283
    %305 = vmatpush1.msra.mxu0 %v282
    %306 = vmatprep.subr.mxu0 0.0
    %307 = vmatpush1.msra.mxu0 0.0
    %308 = vmatprep.subr.mxu0 0.0
    %309 = vmatpush1.msra.mxu0 0.0
    %310 = vmatprep.subr.mxu0 0.0
    %311 = vmatpush1.msra.mxu0 0.0
    %312 = vmatprep.subr.mxu0 0.0
    %313 = vmatpush1.msra.mxu0 0.0
    %314 = vmatprep.subr.mxu0 0.0
    %315 = vmatpush1.msra.mxu0 0.0
    %316 = vmatprep.subr.mxu0 0.0
    %317 = vmatpush1.msra.mxu0 0.0
    %318 = vmatprep.subr.mxu0 0.0
    %319 = vmatpush1.msra.mxu0 0.0
    %320 = vmatprep.subr.mxu0 0.0
    %321 = vmatpush1.msra.mxu0 0.0
    %322 = vmatprep.subr.mxu0 0.0
    %323 = vmatpush1.msra.mxu0 0.0
    %324 = vmatprep.subr.mxu0 0.0
    %325 = vmatpush1.msra.mxu0 0.0
    %326 = vmatprep.subr.mxu0 0.0
    %327 = vmatpush1.msra.mxu0 0.0
    %328 = vmatprep.subr.mxu0 0.0
    %329 = vmatpush1.msra.mxu0 0.0
    %330 = vmatprep.subr.mxu0 0.0
    %331 = vmatpush1.msra.mxu0 0.0
    %332 = vmatprep.subr.mxu0 0.0
    %333 = vmatpush1.msra.mxu0 0.0
    %334 = vmatprep.subr.mxu0 0.0
    %335 = vmatpush1.msra.mxu0 0.0
    %336 = vmatprep.subr.mxu0 0.0
    %337 = vmatpush1.msra.mxu0 0.0
    %338 = vmatprep.subr.mxu0 0.0
    %339 = vmatpush1.msra.mxu0 0.0
    %340 = vmatprep.subr.mxu0 0.0
    %341 = vmatpush1.msra.mxu0 0.0
    %342 = vmatprep.subr.mxu0 0.0
    %343 = vmatpush1.msra.mxu0 0.0
    %344 = vmatprep.subr.mxu0 0.0
    %345 = vmatpush1.msra.mxu0 0.0
    %346 = vmatprep.subr.mxu0 0.0
    %347 = vmatpush1.msra.mxu0 0.0
    %348 = vmatprep.subr.mxu0 0.0
    %349 = vmatpush1.msra.mxu0 0.0
    %350 = vmatprep.subr.mxu0 0.0
    %351 = vmatpush1.msra.mxu0 0.0
    %352 = vmatprep.mubr.f32.mxu0 0.0
    %353 = vmatmul.mubr.f32.gmra.mrb[0].mxu0 %v286
    %v354 = vpop.f32.mrb[0].mxu0
    %v355 = vadd.f32 0.0, %v354
    %v356 = vpop.f32.mrb[0].mxu0
    %v357 = vadd.f32 0.0, %v356
    %358 = vdwg.mxu0
    %v359 = vadd.f32 %v355, %v357
    %360 = vadd.xlane.f32.xlu0 %v359
    %v361 = vpop.xlane.xlu0 %360
    %v362 = vmul.f32 %v361, 0.00390625
    %v363 = vsub.f32 %v355, %v362
    %v364 = vsub.f32 %v357, %v362
    %v365 = vmul.f32 %v363, %v363
    %v366 = vmul.f32 %v364, %v364
    %v367 = vadd.f32 %v365, %v366
    %368 = vadd.xlane.f32.xlu0 %v367
    %v369 = vpop.xlane.xlu0 %368
    %v370 = vmul.f32 %v369, 0.00390625
    %v371 = vadd.f32 %v370, 1e-05
    %v372 = vrsqrt.pop %v371
    %v373 = vmul.f32 %v363, %v372
    %v374 = vmul.f32 %v364, %v372
    %v375 = vmax.f32 %v373, 0.0
    %v376 = vmax.f32 %v374, 0.0
    %377 = vrot.lane.b32.xlu0 %v375, 17
    %v378 = vpop.permute.xlu0 %377
    %379 = vrot.lane.b32.xlu0 %v376, 17
    %v380 = vpop.permute.xlu0 %379
    %v381 = vsel %vm76, %v378, %v380
    %v382 = vsel %vm76, %v380, %v378
    %v383 = vld [vmem:[#allocation10] ss:$8 sm:$0x3]
    %v385 = vlaneseq
    %v386 = vshrl.u32 %v385, 7
    %v387 = vsub.s32 0, %v386
    %v388 = vrot.slane %v383, %v387
    %v389 = vlaneseq
    %v390 = vshrl.u32 %v389, 7
    %v391 = vsub.s32 1, %v390
    %v392 = vrot.slane %v383, %v391
    %v395 = vmul.f32 %v382, %v388
    %v396 = vmul.f32 %v381, %v392
    %397 = vst [vmem:[#allocation3] sm:$0xff] %v395
    %398 = vst [vmem:[#allocation3 + $0x8] sm:$0xff] %v396
    %399 = vrot.lane.b32.xlu0 %v375, 16
    %v400 = vpop.permute.xlu0 %399
    %401 = vrot.lane.b32.xlu0 %v376, 16
    %v402 = vpop.permute.xlu0 %401
    %v403 = vsel %vm99, %v400, %v402
    %v404 = vsel %vm99, %v402, %v400
    %v405 = vld [vmem:[%s102] ss:$8 sm:$0x3]
    %v407 = vlaneseq
    %v408 = vshrl.u32 %v407, 7
    %v409 = vsub.s32 0, %v408
    %v410 = vrot.slane %v405, %v409
    %v411 = vlaneseq
    %v412 = vshrl.u32 %v411, 7
    %v413 = vsub.s32 1, %v412
    %v414 = vrot.slane %v405, %v413
    %v417 = vmul.f32 %v404, %v410
    %v418 = vmul.f32 %v403, %v414
    %419 = vst [vmem:[#allocation3 + $0x10] sm:$0xff] %v417
    %420 = vst [vmem:[#allocation3 + $0x18] sm:$0xff] %v418
    %421 = vrot.lane.b32.xlu0 %v375, 15
    %v422 = vpop.permute.xlu0 %421
    %423 = vrot.lane.b32.xlu0 %v376, 15
    %v424 = vpop.permute.xlu0 %423
    %v425 = vsel %vm123, %v422, %v424
    %v426 = vsel %vm123, %v424, %v422
    %v427 = vld [vmem:[%s126] ss:$8 sm:$0x3]
    %v429 = vlaneseq
    %v430 = vshrl.u32 %v429, 7
    %v431 = vsub.s32 0, %v430
    %v432 = vrot.slane %v427, %v431
    %v433 = vlaneseq
    %v434 = vshrl.u32 %v433, 7
    %v435 = vsub.s32 1, %v434
    %v436 = vrot.slane %v427, %v435
    %v439 = vmul.f32 %v426, %v432
    %v440 = vmul.f32 %v425, %v436
    %441 = vst [vmem:[#allocation3 + $0x20] sm:$0xff] %v439
    %442 = vst [vmem:[#allocation3 + $0x28] sm:$0xff] %v440
    %443 = vrot.lane.b32.xlu0 %v375, 1
    %v444 = vpop.permute.xlu0 %443
    %445 = vrot.lane.b32.xlu0 %v376, 1
    %v446 = vpop.permute.xlu0 %445
    %v447 = vsel %vm147, %v444, %v446
    %v448 = vsel %vm147, %v446, %v444
    %v449 = vld [vmem:[%s150] ss:$8 sm:$0x3]
    %v451 = vlaneseq
    %v452 = vshrl.u32 %v451, 7
    %v453 = vsub.s32 0, %v452
    %v454 = vrot.slane %v449, %v453
    %v455 = vlaneseq
    %v456 = vshrl.u32 %v455, 7
    %v457 = vsub.s32 1, %v456
    %v458 = vrot.slane %v449, %v457
    %v461 = vmul.f32 %v448, %v454
    %v462 = vmul.f32 %v447, %v458
    %463 = vst [vmem:[#allocation3 + $0x30] sm:$0xff] %v461
    %464 = vst [vmem:[#allocation3 + $0x38] sm:$0xff] %v462
    %465 = vst [vmem:[#allocation3 + $0x40] sm:$0xff] %v375
    %466 = vst [vmem:[#allocation3 + $0x48] sm:$0xff] %v376
    %467 = vrot.lane.b32.xlu0 %v375, 127
    %v468 = vpop.permute.xlu0 %467
    %469 = vrot.lane.b32.xlu0 %v376, 127
    %v470 = vpop.permute.xlu0 %469
    %v471 = vsel %vm173, %v468, %v470
    %v472 = vsel %vm173, %v470, %v468
    %v473 = vld [vmem:[%s176] ss:$8 sm:$0x3]
    %v475 = vlaneseq
    %v476 = vshrl.u32 %v475, 7
    %v477 = vsub.s32 0, %v476
    %v478 = vrot.slane %v473, %v477
    %v479 = vlaneseq
    %v480 = vshrl.u32 %v479, 7
    %v481 = vsub.s32 1, %v480
    %v482 = vrot.slane %v473, %v481
    %v485 = vmul.f32 %v471, %v478
    %v486 = vmul.f32 %v472, %v482
    %487 = vst [vmem:[#allocation3 + $0x50] sm:$0xff] %v485
    %488 = vst [vmem:[#allocation3 + $0x58] sm:$0xff] %v486
    %489 = vrot.lane.b32.xlu0 %v375, 113
    %v490 = vpop.permute.xlu0 %489
    %491 = vrot.lane.b32.xlu0 %v376, 113
    %v492 = vpop.permute.xlu0 %491
    %v493 = vsel %vm197, %v490, %v492
    %v494 = vsel %vm197, %v492, %v490
    %v495 = vld [vmem:[%s200] ss:$8 sm:$0x3]
    %v497 = vlaneseq
    %v498 = vshrl.u32 %v497, 7
    %v499 = vsub.s32 0, %v498
    %v500 = vrot.slane %v495, %v499
    %v501 = vlaneseq
    %v502 = vshrl.u32 %v501, 7
    %v503 = vsub.s32 1, %v502
    %v504 = vrot.slane %v495, %v503
    %v507 = vmul.f32 %v493, %v500
    %v508 = vmul.f32 %v494, %v504
    %509 = vst [vmem:[#allocation3 + $0x60] sm:$0xff] %v507
    %510 = vst [vmem:[#allocation3 + $0x68] sm:$0xff] %v508
    %511 = vrot.lane.b32.xlu0 %v375, 112
    %v512 = vpop.permute.xlu0 %511
    %513 = vrot.lane.b32.xlu0 %v376, 112
    %v514 = vpop.permute.xlu0 %513
    %v515 = vsel %vm221, %v512, %v514
    %v516 = vsel %vm221, %v514, %v512
    %v517 = vld [vmem:[%s224] ss:$8 sm:$0x3]
    %v519 = vlaneseq
    %v520 = vshrl.u32 %v519, 7
    %v521 = vsub.s32 0, %v520
    %v522 = vrot.slane %v517, %v521
    %v523 = vlaneseq
    %v524 = vshrl.u32 %v523, 7
    %v525 = vsub.s32 1, %v524
    %v526 = vrot.slane %v517, %v525
    %v529 = vmul.f32 %v515, %v522
    %v530 = vmul.f32 %v516, %v526
    %531 = vst [vmem:[#allocation3 + $0x70] sm:$0xff] %v529
    %532 = vst [vmem:[#allocation3 + $0x78] sm:$0xff] %v530
    %533 = vrot.lane.b32.xlu0 %v375, 111
    %v534 = vpop.permute.xlu0 %533
    %535 = vrot.lane.b32.xlu0 %v376, 111
    %v536 = vpop.permute.xlu0 %535
    %v537 = vsel %vm245, %v534, %v536
    %v538 = vsel %vm245, %v536, %v534
    %v539 = vld [vmem:[%s248] ss:$8 sm:$0x3]
    %v541 = vlaneseq
    %v542 = vshrl.u32 %v541, 7
    %v543 = vsub.s32 0, %v542
    %v544 = vrot.slane %v539, %v543
    %v545 = vlaneseq
    %v546 = vshrl.u32 %v545, 7
    %v547 = vsub.s32 1, %v546
    %v548 = vrot.slane %v539, %v547
    %v551 = vmul.f32 %v537, %v544
    %v552 = vmul.f32 %v538, %v548
    %553 = vst [vmem:[#allocation3 + $0x80] sm:$0xff] %v551
    %554 = vst [vmem:[#allocation3 + $0x88] sm:$0xff] %v552
    %v555 = vld [vmem:[#allocation8] sm:$0xff]
    %v556 = vld [vmem:[#allocation3] sm:$0xff]
    %v557 = vld [vmem:[#allocation3 + $0x8] sm:$0xff]
    %v558 = vld [vmem:[#allocation3 + $0x10] sm:$0xff]
    %v559 = vld [vmem:[#allocation3 + $0x18] sm:$0xff]
    %v560 = vld [vmem:[#allocation3 + $0x20] sm:$0xff]
    %v561 = vld [vmem:[#allocation3 + $0x28] sm:$0xff]
    %v562 = vld [vmem:[#allocation3 + $0x30] sm:$0xff]
    %v563 = vld [vmem:[#allocation3 + $0x38] sm:$0xff]
    %v564 = vld [vmem:[#allocation3 + $0x40] sm:$0xff]
    %v565 = vld [vmem:[#allocation3 + $0x48] sm:$0xff]
    %v566 = vld [vmem:[#allocation3 + $0x50] sm:$0xff]
    %v567 = vld [vmem:[#allocation3 + $0x58] sm:$0xff]
    %v568 = vld [vmem:[#allocation3 + $0x60] sm:$0xff]
    %v569 = vld [vmem:[#allocation3 + $0x68] sm:$0xff]
    %v570 = vld [vmem:[#allocation3 + $0x70] sm:$0xff]
    %v571 = vld [vmem:[#allocation3 + $0x78] sm:$0xff]
    %v572 = vld [vmem:[#allocation3 + $0x80] sm:$0xff]
    %v573 = vld [vmem:[#allocation3 + $0x88] sm:$0xff]
    %v575 = vsel %vm284, %v555, 0
    %577 = vmatprep.subr.mxu0 %v557
    %578 = vmatpush1.msra.mxu0 %v556
    %579 = vmatprep.subr.mxu0 %v559
    %580 = vmatpush1.msra.mxu0 %v558
    %581 = vmatprep.subr.mxu0 %v561
    %582 = vmatpush1.msra.mxu0 %v560
    %583 = vmatprep.subr.mxu0 %v563
    %584 = vmatpush1.msra.mxu0 %v562
    %585 = vmatprep.subr.mxu0 %v565
    %586 = vmatpush1.msra.mxu0 %v564
    %587 = vmatprep.subr.mxu0 %v567
    %588 = vmatpush1.msra.mxu0 %v566
    %589 = vmatprep.subr.mxu0 %v569
    %590 = vmatpush1.msra.mxu0 %v568
    %591 = vmatprep.subr.mxu0 %v571
    %592 = vmatpush1.msra.mxu0 %v570
    %593 = vmatprep.subr.mxu0 %v573
    %594 = vmatpush1.msra.mxu0 %v572
    %595 = vmatprep.subr.mxu0 0.0
    %596 = vmatpush1.msra.mxu0 0.0
    %597 = vmatprep.subr.mxu0 0.0
    %598 = vmatpush1.msra.mxu0 0.0
    %599 = vmatprep.subr.mxu0 0.0
    %600 = vmatpush1.msra.mxu0 0.0
    %601 = vmatprep.subr.mxu0 0.0
    %602 = vmatpush1.msra.mxu0 0.0
    %603 = vmatprep.subr.mxu0 0.0
    %604 = vmatpush1.msra.mxu0 0.0
    %605 = vmatprep.subr.mxu0 0.0
    %606 = vmatpush1.msra.mxu0 0.0
    %607 = vmatprep.subr.mxu0 0.0
    %608 = vmatpush1.msra.mxu0 0.0
    %609 = vmatprep.subr.mxu0 0.0
    %610 = vmatpush1.msra.mxu0 0.0
    %611 = vmatprep.subr.mxu0 0.0
    %612 = vmatpush1.msra.mxu0 0.0
    %613 = vmatprep.subr.mxu0 0.0
    %614 = vmatpush1.msra.mxu0 0.0
    %615 = vmatprep.subr.mxu0 0.0
    %616 = vmatpush1.msra.mxu0 0.0
    %617 = vmatprep.subr.mxu0 0.0
    %618 = vmatpush1.msra.mxu0 0.0
    %619 = vmatprep.subr.mxu0 0.0
    %620 = vmatpush1.msra.mxu0 0.0
    %621 = vmatprep.subr.mxu0 0.0
    %622 = vmatpush1.msra.mxu0 0.0
    %623 = vmatprep.subr.mxu0 0.0
    %624 = vmatpush1.msra.mxu0 0.0
    %625 = vmatprep.subr.mxu0 0.0
    %626 = vmatpush1.msra.mxu0 0.0
    %627 = vmatprep.subr.mxu0 0.0
    %628 = vmatpush1.msra.mxu0 0.0
    %629 = vmatprep.subr.mxu0 0.0
    %630 = vmatpush1.msra.mxu0 0.0
    %631 = vmatprep.subr.mxu0 0.0
    %632 = vmatpush1.msra.mxu0 0.0
    %633 = vmatprep.subr.mxu0 0.0
    %634 = vmatpush1.msra.mxu0 0.0
    %635 = vmatprep.subr.mxu0 0.0
    %636 = vmatpush1.msra.mxu0 0.0
    %637 = vmatprep.subr.mxu0 0.0
    %638 = vmatpush1.msra.mxu0 0.0
    %639 = vmatprep.subr.mxu0 0.0
    %640 = vmatpush1.msra.mxu0 0.0
    %641 = vmatprep.mubr.f32.mxu0 0.0
    %642 = vmatmul.mubr.f32.gmra.mrb[0].mxu0 %v575
    %v643 = vpop.f32.mrb[0].mxu0
    %v644 = vadd.f32 0.0, %v643
    %v645 = vpop.f32.mrb[0].mxu0
    %v646 = vadd.f32 0.0, %v645
    %647 = vdwg.mxu0
    %v648 = vadd.f32 %v644, %v646
    %649 = vadd.xlane.f32.xlu0 %v648
    %v650 = vpop.xlane.xlu0 %649
    %v651 = vmul.f32 %v650, 0.00390625
    %v652 = vsub.f32 %v644, %v651
    %v653 = vsub.f32 %v646, %v651
    %v654 = vmul.f32 %v652, %v652
    %v655 = vmul.f32 %v653, %v653
    %v656 = vadd.f32 %v654, %v655
    %657 = vadd.xlane.f32.xlu0 %v656
    %v658 = vpop.xlane.xlu0 %657
    %v659 = vmul.f32 %v658, 0.00390625
    %v660 = vadd.f32 %v659, 1e-05
    %v661 = vrsqrt.pop %v660
    %v662 = vmul.f32 %v652, %v661
    %v663 = vmul.f32 %v653, %v661
    %v664 = vadd.f32 %v662, %v68
    %v665 = vadd.f32 %v663, %v69
    %v666 = vmax.f32 %v664, 0.0
    %v667 = vmax.f32 %v665, 0.0
    %668 = vst [vmem:[#allocation11] sm:$0xff] %v666
    %669 = vst [vmem:[#allocation11 + $0x8] sm:$0xff] %v667
    // Predicated region
    $region30: #{tpu_custom_call.1} parent=1 // pred_check
      _
    $region31: #{tpu_custom_call.1} parent=1 // pred_check_branch
      %671 = sbr.rel (0) target = $region33
    $region32: #{tpu_custom_call.1} parent=1 // pred_region
      %s673 = ssub.s32 256, 256
      %674 = vsyncadd [#allocation7], %s673
      %s676 = sshll.u32 [#allocation11], 4
      %s677 = int_to_ptr.vmem [resolvable:$true] %s676
      %679 = dma.vmem_to_hbm [thread:$0]  %s677, 256, %s4, [#allocation7]
    $region33: #{tpu_custom_call.1} parent=1 // pred_fallthru
      _
    // Predicated region
    $region34: #{tpu_custom_call.1} parent=1 // pred_check
      _
    $region35: #{tpu_custom_call.1} parent=1 // pred_check_branch
      %681 = sbr.rel (0) target = $region37
    $region36: #{tpu_custom_call.1} parent=1 // pred_region
      %682 = dma.done [#allocation7], 256
    $region37: #{tpu_custom_call.1} parent=1 // pred_fallthru
      _
    %683 = vsyncpa [#allocation6], 1
    %684 = vsyncpa [#allocation9], 1
    %685 = vsyncpa [#allocation7], 1
  %686 = vsyncmov [#allocation4]
  %s687 = vpop.sfrf %686
  %p688 = scmp.eq.s32.totalorder %s687, 0
  %p689 = pneg %p688
  %691 = shalt.err (%p689)

</llo_original>
